<compile_context>
chip_gen: v6e
topology: v6e:2x2x1
jax: 0.10.0
libtpu: 0.0.40
codegen_flags: <defaults>
</compile_context>

<pallas_src>
import jax
import jax.numpy as jnp
from jax.experimental import pallas as pl
from jax.experimental.pallas import tpu as pltpu

_IN, _H1, _H2, _OUT = 22, 64, 32, 1


def _mlp_kernel(xt_ref, w1_ref, b1_ref, w2_ref, b2_ref, w3_ref, b3_ref, o_ref):
    # All blocks are (features, TB): batch on lanes, features on sublanes.
    x = xt_ref[...]                                                    # (22, TB)
    h1 = jnp.dot(w1_ref[...], x, preferred_element_type=jnp.float32)  # (64, TB)
    h1 = jnp.maximum(h1 + b1_ref[...], 0.0)
    h2 = jnp.dot(w2_ref[...], h1, preferred_element_type=jnp.float32) # (32, TB)
    h2 = jnp.maximum(h2 + b2_ref[...], 0.0)
    h3 = jnp.dot(w3_ref[...], h2, preferred_element_type=jnp.float32) # (1, TB)
    o_ref[...] = (h3 + b3_ref[...]).astype(o_ref.dtype)               # lane-dense store


def bp_neural_net_forward(x, params, *, tb=2048):
    """x: (B, 22) float32.  params: w{1,2,3} as (out,in), b{1,2,3} as (out,1)."""
    w1, b1 = params["w1"], params["b1"]
    w2, b2 = params["w2"], params["b2"]
    w3, b3 = params["w3"], params["b3"]
    B = x.shape[0]

    # Batch tile: multiple of 128 lanes; pad B up so the grid divides evenly.
    if B >= tb:
        TB = tb
    else:
        TB = max(128, ((B + 127) // 128) * 128)
    B_pad = ((B + TB - 1) // TB) * TB
    n_tiles = B_pad // TB

    # Layout plumbing (host side): batch onto the lane axis + zero-pad tail.
    xt = jnp.transpose(x)                       # (22, B)
    if B_pad != B:
        xt = jnp.pad(xt, ((0, 0), (0, B_pad - B)))

    const = lambda shape: pl.BlockSpec(shape, lambda i: (0, 0))
    weight_bytes = 4 * (w1.size + b1.size + w2.size + b2.size + w3.size + b3.size)
    cost = pl.CostEstimate(
        flops=2 * B_pad * (_IN * _H1 + _H1 * _H2 + _H2 * _OUT),
        transcendentals=0,
        bytes_accessed=4 * B_pad * (_IN + _OUT) + weight_bytes,
    )

    out_t = pl.pallas_call(
        _mlp_kernel,
        out_shape=jax.ShapeDtypeStruct((_OUT, B_pad), jnp.float32),
        grid=(n_tiles,),
        in_specs=[
            pl.BlockSpec((_IN, TB), lambda i: (0, i)),   # x tile, pipelined
            const(w1.shape), const(b1.shape),            # resident constants
            const(w2.shape), const(b2.shape),
            const(w3.shape), const(b3.shape),
        ],
        out_specs=pl.BlockSpec((_OUT, TB), lambda i: (0, i)),
        compiler_params=pltpu.CompilerParams(
            dimension_semantics=("parallel",),
        ),
        cost_estimate=cost,
    )(xt, w1, b1, w2, b2, w3, b3)

    # Back to the (B, 1) layout of the PyTorch module.
    return jnp.transpose(out_t[:, :B])


def init_params(key):
    """Mimics nn.Linear's U(-1/sqrt(fan_in), 1/sqrt(fan_in)) init.

    Weights stored in native nn.Linear orientation (out_features, in_features);
    biases as (out_features, 1) columns (broadcast over the lane/batch axis).
    """
    sizes = [(_IN, _H1), (_H1, _H2), (_H2, _OUT)]
    params = {}
    keys = jax.random.split(key, 2 * len(sizes))
    for i, (fan_in, fan_out) in enumerate(sizes):
        bound = 1.0 / jnp.sqrt(jnp.float32(fan_in))
        w = jax.random.uniform(keys[2 * i], (fan_out, fan_in),
                               minval=-bound, maxval=bound, dtype=jnp.float32)
        b = jax.random.uniform(keys[2 * i + 1], (fan_out, 1),
                               minval=-bound, maxval=bound, dtype=jnp.float32)
        params[f"w{i+1}"] = w
        params[f"b{i+1}"] = b
    return params


def reference_forward(x, params):
    h = jnp.maximum(x @ params["w1"].T + params["b1"].T, 0.0)
    h = jnp.maximum(h @ params["w2"].T + params["b2"].T, 0.0)
    return h @ params["w3"].T + params["b3"].T


if __name__ == "__main__":
    key = jax.random.PRNGKey(0)
    pkey, xkey1, xkey2 = jax.random.split(key, 3)
    params = init_params(pkey)

    # Small primary check (single tile).
    batch = 8
    x = jax.random.normal(xkey1, (batch, _IN), dtype=jnp.float32)
    out = jax.block_until_ready(bp_neural_net_forward(x, params))
    ref = reference_forward(x, params)
    assert out.shape == (batch, 1), out.shape
    assert jnp.allclose(out, ref, atol=1e-5, rtol=1e-5), "mismatch vs reference (batch=8)"

    # Ragged, multi-tile check (exercises grid, padding and the parallel axis).
    batch2 = 300
    x2 = jax.random.normal(xkey2, (batch2, _IN), dtype=jnp.float32)
    out2 = jax.block_until_ready(bp_neural_net_forward(x2, params, tb=128))
    ref2 = reference_forward(x2, params)
    assert out2.shape == (batch2, 1), out2.shape
    assert jnp.allclose(out2, ref2, atol=1e-5, rtol=1e-5), "mismatch vs reference (batch=300)"

    print("KERNEL_OK")
</pallas_src>

<mosaic_0001>
module attributes {stable_mosaic.version = 11 : i64} {
  func.func @_mlp_kernel(%arg0: i32, %arg1: memref<22x128xf32, #tpu.memory_space<vmem>>, %arg2: memref<64x22xf32, #tpu.memory_space<vmem>>, %arg3: memref<64x1xf32, #tpu.memory_space<vmem>>, %arg4: memref<32x64xf32, #tpu.memory_space<vmem>>, %arg5: memref<32x1xf32, #tpu.memory_space<vmem>>, %arg6: memref<1x32xf32, #tpu.memory_space<vmem>>, %arg7: memref<1x1xf32, #tpu.memory_space<vmem>>, %arg8: memref<1x128xf32, #tpu.memory_space<vmem>>) attributes {dimension_semantics = [#tpu.dimension_semantics<parallel>], iteration_bounds = array<i64: 1>, scalar_prefetch = 0 : i64, scratch_operands = 0 : i64, tpu.core_type = #tpu.core_type<tc>, window_params = [{transform_indices = @transform_0, window_bounds = array<i64: 22, 128>}, {pipeline_mode = #tpu.pipeline_mode<synchronous>, transform_indices = @transform_1, window_bounds = array<i64: 64, 22>}, {pipeline_mode = #tpu.pipeline_mode<synchronous>, transform_indices = @transform_2, window_bounds = array<i64: 64, 1>}, {pipeline_mode = #tpu.pipeline_mode<synchronous>, transform_indices = @transform_3, window_bounds = array<i64: 32, 64>}, {pipeline_mode = #tpu.pipeline_mode<synchronous>, transform_indices = @transform_4, window_bounds = array<i64: 32, 1>}, {pipeline_mode = #tpu.pipeline_mode<synchronous>, transform_indices = @transform_5, window_bounds = array<i64: 1, 32>}, {pipeline_mode = #tpu.pipeline_mode<synchronous>, transform_indices = @transform_6, window_bounds = array<i64: 1, 1>}, {transform_indices = @transform_7, window_bounds = array<i64: 1, 128>}]} {
    %c0 = arith.constant 0 : index
    %c0_0 = arith.constant 0 : index
    %0 = vector.load %arg1[%c0, %c0_0] : memref<22x128xf32, #tpu.memory_space<vmem>>, vector<22x128xf32>
    %c0_1 = arith.constant 0 : index
    %c0_2 = arith.constant 0 : index
    %1 = vector.load %arg2[%c0_1, %c0_2] : memref<64x22xf32, #tpu.memory_space<vmem>>, vector<64x22xf32>
    %cst = arith.constant dense<0.000000e+00> : vector<64x128xf32>
    %2 = tpu.matmul %1, %0, %cst {dimension_numbers = #tpu.dot_dimension_numbers<[1], [0], [0], [1], [0, 0, 1, 1], [], []>} : vector<64x22xf32>, vector<22x128xf32>, vector<64x128xf32> -> vector<64x128xf32>
    %c0_3 = arith.constant 0 : index
    %c0_4 = arith.constant 0 : index
    %3 = vector.load %arg3[%c0_3, %c0_4] : memref<64x1xf32, #tpu.memory_space<vmem>>, vector<64x1xf32>
    %4 = vector.broadcast %3 : vector<64x1xf32> to vector<64x128xf32>
    %5 = arith.addf %2, %4 : vector<64x128xf32>
    %cst_5 = arith.constant 0.000000e+00 : f32
    %6 = vector.broadcast %cst_5 : f32 to vector<64x128xf32>
    %7 = arith.maximumf %5, %6 : vector<64x128xf32>
    %c0_6 = arith.constant 0 : index
    %c0_7 = arith.constant 0 : index
    %8 = vector.load %arg4[%c0_6, %c0_7] : memref<32x64xf32, #tpu.memory_space<vmem>>, vector<32x64xf32>
    %cst_8 = arith.constant dense<0.000000e+00> : vector<32x128xf32>
    %9 = tpu.matmul %8, %7, %cst_8 {dimension_numbers = #tpu.dot_dimension_numbers<[1], [0], [0], [1], [0, 0, 1, 1], [], []>} : vector<32x64xf32>, vector<64x128xf32>, vector<32x128xf32> -> vector<32x128xf32>
    %c0_9 = arith.constant 0 : index
    %c0_10 = arith.constant 0 : index
    %10 = vector.load %arg5[%c0_9, %c0_10] : memref<32x1xf32, #tpu.memory_space<vmem>>, vector<32x1xf32>
    %11 = vector.broadcast %10 : vector<32x1xf32> to vector<32x128xf32>
    %12 = arith.addf %9, %11 : vector<32x128xf32>
    %cst_11 = arith.constant 0.000000e+00 : f32
    %13 = vector.broadcast %cst_11 : f32 to vector<32x128xf32>
    %14 = arith.maximumf %12, %13 : vector<32x128xf32>
    %c0_12 = arith.constant 0 : index
    %c0_13 = arith.constant 0 : index
    %15 = vector.load %arg6[%c0_12, %c0_13] : memref<1x32xf32, #tpu.memory_space<vmem>>, vector<1x32xf32>
    %cst_14 = arith.constant dense<0.000000e+00> : vector<1x128xf32>
    %16 = tpu.matmul %15, %14, %cst_14 {dimension_numbers = #tpu.dot_dimension_numbers<[1], [0], [0], [1], [0, 0, 1, 1], [], []>} : vector<1x32xf32>, vector<32x128xf32>, vector<1x128xf32> -> vector<1x128xf32>
    %c0_15 = arith.constant 0 : index
    %c0_16 = arith.constant 0 : index
    %17 = vector.load %arg7[%c0_15, %c0_16] : memref<1x1xf32, #tpu.memory_space<vmem>>, vector<1x1xf32>
    %18 = vector.broadcast %17 : vector<1x1xf32> to vector<1x128xf32>
    %19 = arith.addf %16, %18 : vector<1x128xf32>
    %c0_17 = arith.constant 0 : index
    %c0_18 = arith.constant 0 : index
    %20 = vector.load %arg8[%c0_17, %c0_18] : memref<1x128xf32, #tpu.memory_space<vmem>>, vector<1x128xf32>
    tpu.vector_store %arg8[%c0_17, %c0_18], %19 {strides = array<i32>} : memref<1x128xf32, #tpu.memory_space<vmem>>, vector<1x128xf32>,
    return
  }
  func.func @transform_0(%arg0: i32) -> (i32, i32) {
    %c0_i32 = arith.constant 0 : i32
    %c0_i32_0 = arith.constant 0 : i32
    return %c0_i32, %arg0 : i32, i32
  }
  func.func @transform_1(%arg0: i32) -> (i32, i32) {
    %c0_i32 = arith.constant 0 : i32
    %c0_i32_0 = arith.constant 0 : i32
    %c0_i32_1 = arith.constant 0 : i32
    return %c0_i32, %c0_i32_0 : i32, i32
  }
  func.func @transform_2(%arg0: i32) -> (i32, i32) {
    %c0_i32 = arith.constant 0 : i32
    %c0_i32_0 = arith.constant 0 : i32
    %c0_i32_1 = arith.constant 0 : i32
    return %c0_i32, %c0_i32_0 : i32, i32
  }
  func.func @transform_3(%arg0: i32) -> (i32, i32) {
    %c0_i32 = arith.constant 0 : i32
    %c0_i32_0 = arith.constant 0 : i32
    %c0_i32_1 = arith.constant 0 : i32
    return %c0_i32, %c0_i32_0 : i32, i32
  }
  func.func @transform_4(%arg0: i32) -> (i32, i32) {
    %c0_i32 = arith.constant 0 : i32
    %c0_i32_0 = arith.constant 0 : i32
    %c0_i32_1 = arith.constant 0 : i32
    return %c0_i32, %c0_i32_0 : i32, i32
  }
  func.func @transform_5(%arg0: i32) -> (i32, i32) {
    %c0_i32 = arith.constant 0 : i32
    %c0_i32_0 = arith.constant 0 : i32
    %c0_i32_1 = arith.constant 0 : i32
    return %c0_i32, %c0_i32_0 : i32, i32
  }
  func.func @transform_6(%arg0: i32) -> (i32, i32) {
    %c0_i32 = arith.constant 0 : i32
    %c0_i32_0 = arith.constant 0 : i32
    %c0_i32_1 = arith.constant 0 : i32
    return %c0_i32, %c0_i32_0 : i32, i32
  }
  func.func @transform_7(%arg0: i32) -> (i32, i32) {
    %c0_i32 = arith.constant 0 : i32
    %c0_i32_0 = arith.constant 0 : i32
    return %c0_i32, %arg0 : i32, i32
  }
}

</mosaic_0001>

<llo_original>
// kernel: tpu_custom_call.1
$region0: #{tpu_custom_call.1}
  #allocation0 [shape = 'u32[]', space=smem, size = 0x4, offset = 0x4, fixed_abs, tag = 'smem constant byte address 0x4 - core index']
  #allocation1 [shape = 'u32[144,128]{1,0:T(1,128)}', space=vmem, size = 0x12000, scoped, tag = 'internal scratch']
  #allocation2 [shape = 'f32[1,1]{1,0:T(1,128)S(1)}', space=vmem, size = 0x200, scoped, tag = 'scoped memory for tpu_custom_call.1']
  %s0 = inlined_call_operand.vmem [shape: f32[22,128], index: 0, kind: input, shape index: {}]
  %s1 = inlined_call_operand.vmem [shape: f32[64,22], index: 1, kind: input, shape index: {}]
  %s2 = inlined_call_operand.vmem [shape: f32[64,1], index: 2, kind: input, shape index: {}]
  %s3 = inlined_call_operand.vmem [shape: f32[32,64], index: 3, kind: input, shape index: {}]
  %s4 = inlined_call_operand.vmem [shape: f32[32,1], index: 4, kind: input, shape index: {}]
  %s5 = inlined_call_operand.vmem [shape: f32[1,32], index: 5, kind: input, shape index: {}]
  %s6 = inlined_call_operand.<no memory space> [shape: f32[1,1], index: 6, kind: input, shape index: {}]
  %s7 = inlined_call_operand.hbm [shape: f32[1,128], index: 7, kind: output, shape index: {}]
  %s8 = sld [smem:[#allocation0]]
  $region38: #{tpu_custom_call.1} parent=0
    _
  %s10 = ssub.s32 1, %s8
  %s11 = scalar_select 0, %s10, %s8
  %v12 = vstv %s6
  %13 = vst [vmem:[#allocation2] sm:$0x1] %v12
  $region1: #{tpu_custom_call.1} parent=0
    #allocation3 [shape = 'u8[512]{0}', space=vmem, size = 0x400, scoped, tag = 'output window, operand 0, single buffered']
    #allocation4 [shape = 's32[1]{0}', space=sflag, size = 0x4, scoped, tag = 'scoped memory for tpu_custom_call.1']
    %14 = vsyncpa [#allocation4], 0
    // Predicated region
    $region2: #{tpu_custom_call.1} parent=1 // pred_check
      _
    $region3: #{tpu_custom_call.1} parent=1 // pred_check_branch
      %16 = sbr.rel (0) target = $region5
    $region4: #{tpu_custom_call.1} parent=1 // pred_region
      _
    $region5: #{tpu_custom_call.1} parent=1 // pred_fallthru
      _
    // Predicated region
    $region6: #{tpu_custom_call.1} parent=1 // pred_check
      _
    $region7: #{tpu_custom_call.1} parent=1 // pred_check_branch
      %18 = sbr.rel (0) target = $region9
    $region8: #{tpu_custom_call.1} parent=1 // pred_region
      _
    $region9: #{tpu_custom_call.1} parent=1 // pred_fallthru
      _
    // Predicated region
    $region10: #{tpu_custom_call.1} parent=1 // pred_check
      _
    $region11: #{tpu_custom_call.1} parent=1 // pred_check_branch
      %20 = sbr.rel (0) target = $region13
    $region12: #{tpu_custom_call.1} parent=1 // pred_region
      _
    $region13: #{tpu_custom_call.1} parent=1 // pred_fallthru
      _
    // Predicated region
    $region14: #{tpu_custom_call.1} parent=1 // pred_check
      _
    $region15: #{tpu_custom_call.1} parent=1 // pred_check_branch
      %22 = sbr.rel (0) target = $region17
    $region16: #{tpu_custom_call.1} parent=1 // pred_region
      _
    $region17: #{tpu_custom_call.1} parent=1 // pred_fallthru
      _
    // Predicated region
    $region18: #{tpu_custom_call.1} parent=1 // pred_check
      _
    $region19: #{tpu_custom_call.1} parent=1 // pred_check_branch
      %24 = sbr.rel (0) target = $region21
    $region20: #{tpu_custom_call.1} parent=1 // pred_region
      _
    $region21: #{tpu_custom_call.1} parent=1 // pred_fallthru
      _
    // Predicated region
    $region22: #{tpu_custom_call.1} parent=1 // pred_check
      _
    $region23: #{tpu_custom_call.1} parent=1 // pred_check_branch
      %26 = sbr.rel (0) target = $region25
    $region24: #{tpu_custom_call.1} parent=1 // pred_region
      _
    $region25: #{tpu_custom_call.1} parent=1 // pred_fallthru
      _
    // Predicated region
    $region26: #{tpu_custom_call.1} parent=1 // pred_check
      _
    $region27: #{tpu_custom_call.1} parent=1 // pred_check_branch
      %28 = sbr.rel (0) target = $region29
    $region28: #{tpu_custom_call.1} parent=1 // pred_region
      _
    $region29: #{tpu_custom_call.1} parent=1 // pred_fallthru
      _
    %v29 = vld [vmem:[%s0] sm:$0xff]
    %v30 = vld [vmem:[%s0 + $0x8] sm:$0xff]
    %v31 = vld [vmem:[%s0 + $0x10] sm:$0x3f]
    %v32 = vld [vmem:[%s1] sm:$0xff]
    %v33 = vld [vmem:[%s1 + $0x8] sm:$0xff]
    %v34 = vld [vmem:[%s1 + $0x10] sm:$0xff]
    %v35 = vld [vmem:[%s1 + $0x18] sm:$0xff]
    %v36 = vld [vmem:[%s1 + $0x20] sm:$0xff]
    %v37 = vld [vmem:[%s1 + $0x28] sm:$0xff]
    %v38 = vld [vmem:[%s1 + $0x30] sm:$0xff]
    %v39 = vld [vmem:[%s1 + $0x38] sm:$0xff]
    %v40 = vld [vmem:[%s2] sm:$0xff]
    %v41 = vld [vmem:[%s2 + $0x8] sm:$0xff]
    %v42 = vld [vmem:[%s2 + $0x10] sm:$0xff]
    %v43 = vld [vmem:[%s2 + $0x18] sm:$0xff]
    %v44 = vld [vmem:[%s2 + $0x20] sm:$0xff]
    %v45 = vld [vmem:[%s2 + $0x28] sm:$0xff]
    %v46 = vld [vmem:[%s2 + $0x30] sm:$0xff]
    %v47 = vld [vmem:[%s2 + $0x38] sm:$0xff]
    %49 = vset.pattern.permute.xlu0 0
    %50 = vperm.xlu0 %49, %v40
    %v51 = vpop.permute.xlu0 %50
    %54 = vset.pattern.permute.xlu0 0
    %55 = vperm.xlu0 %54, %v41
    %v56 = vpop.permute.xlu0 %55
    %59 = vset.pattern.permute.xlu0 0
    %60 = vperm.xlu0 %59, %v42
    %v61 = vpop.permute.xlu0 %60
    %64 = vset.pattern.permute.xlu0 0
    %65 = vperm.xlu0 %64, %v43
    %v66 = vpop.permute.xlu0 %65
    %69 = vset.pattern.permute.xlu0 0
    %70 = vperm.xlu0 %69, %v44
    %v71 = vpop.permute.xlu0 %70
    %74 = vset.pattern.permute.xlu0 0
    %75 = vperm.xlu0 %74, %v45
    %v76 = vpop.permute.xlu0 %75
    %79 = vset.pattern.permute.xlu0 0
    %80 = vperm.xlu0 %79, %v46
    %v81 = vpop.permute.xlu0 %80
    %84 = vset.pattern.permute.xlu0 0
    %85 = vperm.xlu0 %84, %v47
    %v86 = vpop.permute.xlu0 %85
    %vm88 = vcmask 179200
    %v90 = vsel %vm88, %v32, 0
    %v93 = vsel %vm88, %v33, 0
    %v96 = vsel %vm88, %v34, 0
    %v99 = vsel %vm88, %v35, 0
    %v102 = vsel %vm88, %v36, 0
    %v105 = vsel %vm88, %v37, 0
    %v108 = vsel %vm88, %v38, 0
    %v111 = vsel %vm88, %v39, 0
    %vm113 = vcmask 1045504
    %v115 = vsel %vm113, %v31, 0
    %117 = vmatprep.subr.mxu0 0.0
    %118 = vmatpush1.msra.mxu0 0.0
    %119 = vmatprep.subr.mxu0 0.0
    %120 = vmatpush1.msra.mxu0 0.0
    %121 = vmatprep.subr.mxu0 0.0
    %122 = vmatpush1.msra.mxu0 0.0
    %123 = vmatprep.subr.mxu0 0.0
    %124 = vmatpush1.msra.mxu0 0.0
    %125 = vmatprep.subr.mxu0 0.0
    %126 = vmatpush1.msra.mxu0 0.0
    %127 = vmatprep.subr.mxu0 0.0
    %128 = vmatpush1.msra.mxu0 0.0
    %129 = vmatprep.subr.mxu0 0.0
    %130 = vmatpush1.msra.mxu0 0.0
    %131 = vmatprep.subr.mxu0 0.0
    %132 = vmatpush1.msra.mxu0 0.0
    %133 = vmatprep.subr.mxu0 0.0
    %134 = vmatpush1.msra.mxu0 0.0
    %135 = vmatprep.subr.mxu0 0.0
    %136 = vmatpush1.msra.mxu0 0.0
    %137 = vmatprep.subr.mxu0 0.0
    %138 = vmatpush1.msra.mxu0 0.0
    %139 = vmatprep.subr.mxu0 0.0
    %140 = vmatpush1.msra.mxu0 0.0
    %141 = vmatprep.subr.mxu0 0.0
    %142 = vmatpush1.msra.mxu0 0.0
    %143 = vmatprep.subr.mxu0 0.0
    %144 = vmatpush1.msra.mxu0 %v115
    %145 = vmatprep.subr.mxu0 0.0
    %146 = vmatpush1.msra.mxu0 %v30
    %147 = vmatprep.subr.mxu0 0.0
    %148 = vmatpush1.msra.mxu0 %v29
    %149 = vmatprep.subr.mxu0 0.0
    %150 = vmatpush2.msra.mxu0 0.0
    %151 = vmatprep.subr.mxu0 0.0
    %152 = vmatpush2.msra.mxu0 0.0
    %153 = vmatprep.subr.mxu0 0.0
    %154 = vmatpush2.msra.mxu0 0.0
    %155 = vmatprep.subr.mxu0 0.0
    %156 = vmatpush2.msra.mxu0 0.0
    %157 = vmatprep.subr.mxu0 0.0
    %158 = vmatpush2.msra.mxu0 0.0
    %159 = vmatprep.subr.mxu0 0.0
    %160 = vmatpush2.msra.mxu0 0.0
    %161 = vmatprep.subr.mxu0 0.0
    %162 = vmatpush2.msra.mxu0 0.0
    %163 = vmatprep.subr.mxu0 0.0
    %164 = vmatpush2.msra.mxu0 0.0
    %165 = vmatprep.subr.mxu0 0.0
    %166 = vmatpush2.msra.mxu0 0.0
    %167 = vmatprep.subr.mxu0 0.0
    %168 = vmatpush2.msra.mxu0 0.0
    %169 = vmatprep.subr.mxu0 0.0
    %170 = vmatpush2.msra.mxu0 0.0
    %171 = vmatprep.subr.mxu0 0.0
    %172 = vmatpush2.msra.mxu0 0.0
    %173 = vmatprep.subr.mxu0 0.0
    %174 = vmatpush2.msra.mxu0 0.0
    %175 = vmatprep.subr.mxu0 0.0
    %176 = vmatpush2.msra.mxu0 0.0
    %177 = vmatprep.subr.mxu0 0.0
    %178 = vmatpush2.msra.mxu0 0.0
    %179 = vmatprep.subr.mxu0 0.0
    %180 = vmatpush2.msra.mxu0 0.0
    %181 = vmatprep.mubr.f32.mxu0 0.0
    %182 = vmatmul.mubr.f32.gmra.mxu0 %v90
    %v183 = vpop.f32.mrf.mxu0
    %v184 = vadd.f32 %v51, %v183
    %v185 = vpop.f32.mrf.mxu0
    %186 = vmatprep.mubr.f32.mxu0 0.0
    %187 = vmatmul.mubr.f32.gmra.mxu0 %v93
    %v188 = vpop.f32.mrf.mxu0
    %v189 = vadd.f32 %v56, %v188
    %v190 = vpop.f32.mrf.mxu0
    %191 = vmatprep.mubr.f32.mxu0 0.0
    %192 = vmatmul.mubr.f32.gmra.mxu0 %v96
    %v193 = vpop.f32.mrf.mxu0
    %v194 = vadd.f32 %v61, %v193
    %v195 = vpop.f32.mrf.mxu0
    %196 = vmatprep.mubr.f32.mxu0 0.0
    %197 = vmatmul.mubr.f32.gmra.mxu0 %v99
    %v198 = vpop.f32.mrf.mxu0
    %v199 = vadd.f32 %v66, %v198
    %v200 = vpop.f32.mrf.mxu0
    %201 = vmatprep.mubr.f32.mxu0 0.0
    %202 = vmatmul.mubr.f32.gmra.mxu0 %v102
    %v203 = vpop.f32.mrf.mxu0
    %v204 = vadd.f32 %v71, %v203
    %v205 = vpop.f32.mrf.mxu0
    %206 = vmatprep.mubr.f32.mxu0 0.0
    %207 = vmatmul.mubr.f32.gmra.mxu0 %v105
    %v208 = vpop.f32.mrf.mxu0
    %v209 = vadd.f32 %v76, %v208
    %v210 = vpop.f32.mrf.mxu0
    %211 = vmatprep.mubr.f32.mxu0 0.0
    %212 = vmatmul.mubr.f32.gmra.mxu0 %v108
    %v213 = vpop.f32.mrf.mxu0
    %v214 = vadd.f32 %v81, %v213
    %v215 = vpop.f32.mrf.mxu0
    %216 = vmatprep.mubr.f32.mxu0 0.0
    %217 = vmatmul.mubr.f32.gmra.mxu0 %v111
    %v218 = vpop.f32.mrf.mxu0
    %v219 = vadd.f32 %v86, %v218
    %v220 = vpop.f32.mrf.mxu0
    %221 = vdwg.mxu0
    %v222 = vmax.f32 %v184, 0.0
    %v223 = vmax.f32 %v189, 0.0
    %v224 = vmax.f32 %v194, 0.0
    %v225 = vmax.f32 %v199, 0.0
    %v226 = vmax.f32 %v204, 0.0
    %v227 = vmax.f32 %v209, 0.0
    %v228 = vmax.f32 %v214, 0.0
    %v229 = vmax.f32 %v219, 0.0
    %v230 = vld [vmem:[%s3] sm:$0xff]
    %v231 = vld [vmem:[%s3 + $0x8] sm:$0xff]
    %v232 = vld [vmem:[%s3 + $0x10] sm:$0xff]
    %v233 = vld [vmem:[%s3 + $0x18] sm:$0xff]
    %v234 = vld [vmem:[%s4] sm:$0xff]
    %v235 = vld [vmem:[%s4 + $0x8] sm:$0xff]
    %v236 = vld [vmem:[%s4 + $0x10] sm:$0xff]
    %v237 = vld [vmem:[%s4 + $0x18] sm:$0xff]
    %239 = vset.pattern.permute.xlu0 0
    %240 = vperm.xlu0 %239, %v234
    %v241 = vpop.permute.xlu0 %240
    %244 = vset.pattern.permute.xlu0 0
    %245 = vperm.xlu0 %244, %v235
    %v246 = vpop.permute.xlu0 %245
    %249 = vset.pattern.permute.xlu0 0
    %250 = vperm.xlu0 %249, %v236
    %v251 = vpop.permute.xlu0 %250
    %254 = vset.pattern.permute.xlu0 0
    %255 = vperm.xlu0 %254, %v237
    %v256 = vpop.permute.xlu0 %255
    %vm258 = vcmask 523264
    %v260 = vsel %vm258, %v230, 0
    %v263 = vsel %vm258, %v231, 0
    %v266 = vsel %vm258, %v232, 0
    %v269 = vsel %vm258, %v233, 0
    %271 = vmatprep.subr.mxu0 0.0
    %272 = vmatpush1.msra.mxu0 0.0
    %273 = vmatprep.subr.mxu0 0.0
    %274 = vmatpush1.msra.mxu0 0.0
    %275 = vmatprep.subr.mxu0 0.0
    %276 = vmatpush1.msra.mxu0 0.0
    %277 = vmatprep.subr.mxu0 0.0
    %278 = vmatpush1.msra.mxu0 0.0
    %279 = vmatprep.subr.mxu0 0.0
    %280 = vmatpush1.msra.mxu0 0.0
    %281 = vmatprep.subr.mxu0 0.0
    %282 = vmatpush1.msra.mxu0 0.0
    %283 = vmatprep.subr.mxu0 0.0
    %284 = vmatpush1.msra.mxu0 0.0
    %285 = vmatprep.subr.mxu0 0.0
    %286 = vmatpush1.msra.mxu0 0.0
    %287 = vmatprep.subr.mxu0 0.0
    %288 = vmatpush1.msra.mxu0 %v229
    %289 = vmatprep.subr.mxu0 0.0
    %290 = vmatpush1.msra.mxu0 %v228
    %291 = vmatprep.subr.mxu0 0.0
    %292 = vmatpush1.msra.mxu0 %v227
    %293 = vmatprep.subr.mxu0 0.0
    %294 = vmatpush1.msra.mxu0 %v226
    %295 = vmatprep.subr.mxu0 0.0
    %296 = vmatpush1.msra.mxu0 %v225
    %297 = vmatprep.subr.mxu0 0.0
    %298 = vmatpush1.msra.mxu0 %v224
    %299 = vmatprep.subr.mxu0 0.0
    %300 = vmatpush1.msra.mxu0 %v223
    %301 = vmatprep.subr.mxu0 0.0
    %302 = vmatpush1.msra.mxu0 %v222
    %303 = vmatprep.subr.mxu0 0.0
    %304 = vmatpush2.msra.mxu0 0.0
    %305 = vmatprep.subr.mxu0 0.0
    %306 = vmatpush2.msra.mxu0 0.0
    %307 = vmatprep.subr.mxu0 0.0
    %308 = vmatpush2.msra.mxu0 0.0
    %309 = vmatprep.subr.mxu0 0.0
    %310 = vmatpush2.msra.mxu0 0.0
    %311 = vmatprep.subr.mxu0 0.0
    %312 = vmatpush2.msra.mxu0 0.0
    %313 = vmatprep.subr.mxu0 0.0
    %314 = vmatpush2.msra.mxu0 0.0
    %315 = vmatprep.subr.mxu0 0.0
    %316 = vmatpush2.msra.mxu0 0.0
    %317 = vmatprep.subr.mxu0 0.0
    %318 = vmatpush2.msra.mxu0 0.0
    %319 = vmatprep.subr.mxu0 0.0
    %320 = vmatpush2.msra.mxu0 0.0
    %321 = vmatprep.subr.mxu0 0.0
    %322 = vmatpush2.msra.mxu0 0.0
    %323 = vmatprep.subr.mxu0 0.0
    %324 = vmatpush2.msra.mxu0 0.0
    %325 = vmatprep.subr.mxu0 0.0
    %326 = vmatpush2.msra.mxu0 0.0
    %327 = vmatprep.subr.mxu0 0.0
    %328 = vmatpush2.msra.mxu0 0.0
    %329 = vmatprep.subr.mxu0 0.0
    %330 = vmatpush2.msra.mxu0 0.0
    %331 = vmatprep.subr.mxu0 0.0
    %332 = vmatpush2.msra.mxu0 0.0
    %333 = vmatprep.subr.mxu0 0.0
    %334 = vmatpush2.msra.mxu0 0.0
    %335 = vmatprep.mubr.f32.mxu0 0.0
    %336 = vmatmul.mubr.f32.gmra.mxu0 %v260
    %v337 = vpop.f32.mrf.mxu0
    %v338 = vadd.f32 %v241, %v337
    %v339 = vpop.f32.mrf.mxu0
    %340 = vmatprep.mubr.f32.mxu0 0.0
    %341 = vmatmul.mubr.f32.gmra.mxu0 %v263
    %v342 = vpop.f32.mrf.mxu0
    %v343 = vadd.f32 %v246, %v342
    %v344 = vpop.f32.mrf.mxu0
    %345 = vmatprep.mubr.f32.mxu0 0.0
    %346 = vmatmul.mubr.f32.gmra.mxu0 %v266
    %v347 = vpop.f32.mrf.mxu0
    %v348 = vadd.f32 %v251, %v347
    %v349 = vpop.f32.mrf.mxu0
    %350 = vmatprep.mubr.f32.mxu0 0.0
    %351 = vmatmul.mubr.f32.gmra.mxu0 %v269
    %v352 = vpop.f32.mrf.mxu0
    %v353 = vadd.f32 %v256, %v352
    %v354 = vpop.f32.mrf.mxu0
    %355 = vdwg.mxu0
    %v356 = vmax.f32 %v338, 0.0
    %v357 = vmax.f32 %v343, 0.0
    %v358 = vmax.f32 %v348, 0.0
    %v359 = vmax.f32 %v353, 0.0
    %v360 = vld [vmem:[%s5] sm:$0x1]
    %v361 = vld [vmem:[#allocation2] sm:$0x1]
    %363 = vset.pattern.permute.xlu0 0
    %364 = vperm.xlu0 %363, %v361
    %v365 = vpop.permute.xlu0 %364
    %v367 = vlaneseq
    %v368 = vshrl.u32 %v367, 7
    %v369 = vsub.s32 0, %v368
    %v370 = vrot.slane %v365, %v369
    %vm371 = vcmask 261120
    %v373 = vsel %vm371, %v360, 0
    %375 = vmatprep.subr.mxu0 0.0
    %376 = vmatpush1.msra.mxu0 0.0
    %377 = vmatprep.subr.mxu0 0.0
    %378 = vmatpush1.msra.mxu0 0.0
    %379 = vmatprep.subr.mxu0 0.0
    %380 = vmatpush1.msra.mxu0 0.0
    %381 = vmatprep.subr.mxu0 0.0
    %382 = vmatpush1.msra.mxu0 0.0
    %383 = vmatprep.subr.mxu0 0.0
    %384 = vmatpush1.msra.mxu0 0.0
    %385 = vmatprep.subr.mxu0 0.0
    %386 = vmatpush1.msra.mxu0 0.0
    %387 = vmatprep.subr.mxu0 0.0
    %388 = vmatpush1.msra.mxu0 0.0
    %389 = vmatprep.subr.mxu0 0.0
    %390 = vmatpush1.msra.mxu0 0.0
    %391 = vmatprep.subr.mxu0 0.0
    %392 = vmatpush1.msra.mxu0 0.0
    %393 = vmatprep.subr.mxu0 0.0
    %394 = vmatpush1.msra.mxu0 0.0
    %395 = vmatprep.subr.mxu0 0.0
    %396 = vmatpush1.msra.mxu0 0.0
    %397 = vmatprep.subr.mxu0 0.0
    %398 = vmatpush1.msra.mxu0 0.0
    %399 = vmatprep.subr.mxu0 0.0
    %400 = vmatpush1.msra.mxu0 %v359
    %401 = vmatprep.subr.mxu0 0.0
    %402 = vmatpush1.msra.mxu0 %v358
    %403 = vmatprep.subr.mxu0 0.0
    %404 = vmatpush1.msra.mxu0 %v357
    %405 = vmatprep.subr.mxu0 0.0
    %406 = vmatpush1.msra.mxu0 %v356
    %407 = vmatprep.subr.mxu0 0.0
    %408 = vmatpush2.msra.mxu0 0.0
    %409 = vmatprep.subr.mxu0 0.0
    %410 = vmatpush2.msra.mxu0 0.0
    %411 = vmatprep.subr.mxu0 0.0
    %412 = vmatpush2.msra.mxu0 0.0
    %413 = vmatprep.subr.mxu0 0.0
    %414 = vmatpush2.msra.mxu0 0.0
    %415 = vmatprep.subr.mxu0 0.0
    %416 = vmatpush2.msra.mxu0 0.0
    %417 = vmatprep.subr.mxu0 0.0
    %418 = vmatpush2.msra.mxu0 0.0
    %419 = vmatprep.subr.mxu0 0.0
    %420 = vmatpush2.msra.mxu0 0.0
    %421 = vmatprep.subr.mxu0 0.0
    %422 = vmatpush2.msra.mxu0 0.0
    %423 = vmatprep.subr.mxu0 0.0
    %424 = vmatpush2.msra.mxu0 0.0
    %425 = vmatprep.subr.mxu0 0.0
    %426 = vmatpush2.msra.mxu0 0.0
    %427 = vmatprep.subr.mxu0 0.0
    %428 = vmatpush2.msra.mxu0 0.0
    %429 = vmatprep.subr.mxu0 0.0
    %430 = vmatpush2.msra.mxu0 0.0
    %431 = vmatprep.subr.mxu0 0.0
    %432 = vmatpush2.msra.mxu0 0.0
    %433 = vmatprep.subr.mxu0 0.0
    %434 = vmatpush2.msra.mxu0 0.0
    %435 = vmatprep.subr.mxu0 0.0
    %436 = vmatpush2.msra.mxu0 0.0
    %437 = vmatprep.subr.mxu0 0.0
    %438 = vmatpush2.msra.mxu0 0.0
    %439 = vmatprep.mubr.f32.mxu0 0.0
    %440 = vmatmul.mubr.f32.gmra.mxu0 %v373
    %v441 = vpop.f32.mrf.mxu0
    %v442 = vadd.f32 %v370, %v441
    %v443 = vpop.f32.mrf.mxu0
    %444 = vdwg.mxu0
    %445 = vst [vmem:[#allocation3] sm:$0x1] %v442
    // Predicated region
    $region30: #{tpu_custom_call.1} parent=1 // pred_check
      _
    $region31: #{tpu_custom_call.1} parent=1 // pred_check_branch
      %447 = sbr.rel (0) target = $region33
    $region32: #{tpu_custom_call.1} parent=1 // pred_region
      %s449 = ssub.s32 16, 16
      %450 = vsyncadd [#allocation4], %s449
      %s452 = sshll.u32 [#allocation3], 4
      %s453 = int_to_ptr.vmem [resolvable:$true] %s452
      %455 = dma.vmem_to_hbm [thread:$0]  %s453, 16, %s7, [#allocation4]
    $region33: #{tpu_custom_call.1} parent=1 // pred_fallthru
      _
    // Predicated region
    $region34: #{tpu_custom_call.1} parent=1 // pred_check
      _
    $region35: #{tpu_custom_call.1} parent=1 // pred_check_branch
      %457 = sbr.rel (0) target = $region37
    $region36: #{tpu_custom_call.1} parent=1 // pred_region
      %458 = dma.done [#allocation4], 16
    $region37: #{tpu_custom_call.1} parent=1 // pred_fallthru
      _
    %459 = vsyncpa [#allocation4], 1

</llo_original>
